<compile_context>
chip_gen: v7x
topology: tpu7x:2x2x1
jax: 0.10.0
libtpu: 0.0.40
codegen_flags: <defaults>
</compile_context>

<pallas_src>
import functools

import jax
import jax.numpy as jnp
from jax.experimental import pallas as pl
from jax.experimental.pallas import tpu as pltpu


# ----------------------------------------------------------------------------
# small helpers
# ----------------------------------------------------------------------------
def _round_up(x, m):
    return (x + m - 1) // m * m


def _gelu(x):
    # tanh-approximate GELU (EUP-friendly inside the kernel).
    return 0.5 * x * (1.0 + jnp.tanh(0.7978845608028654 * (x + 0.044715 * x * x * x)))


def _layer_norm(x, gamma, beta, eps=1e-5):
    mu = jnp.mean(x, axis=-1, keepdims=True)
    var = jnp.mean((x - mu) ** 2, axis=-1, keepdims=True)
    return (x - mu) * jax.lax.rsqrt(var + eps) * gamma + beta


def _fold_bn(bn_p, bias=None, eps=1e-5):
    """Fold inference BatchNorm (+ optional conv bias) into per-channel scale/shift."""
    scale = bn_p["gamma"] * jax.lax.rsqrt(bn_p["var"] + eps)
    base = -bn_p["mean"] if bias is None else bias - bn_p["mean"]
    shift = base * scale + bn_p["beta"]
    return scale, shift


# ----------------------------------------------------------------------------
# Kernel 1: tiled matmul + folded BN scale/shift + activation
# ----------------------------------------------------------------------------
def _matmul_scale_shift_act_kernel(x_ref, w_ref, scale_ref, shift_ref, o_ref,
                                   acc_ref, *, act):
    @pl.when(pl.program_id(2) == 0)
    def _():
        acc_ref[...] = jnp.zeros_like(acc_ref)

    acc_ref[...] += jnp.dot(x_ref[...], w_ref[...],
                            preferred_element_type=jnp.float32)

    @pl.when(pl.program_id(2) == pl.num_programs(2) - 1)
    def _():
        y = acc_ref[...] * scale_ref[...] + shift_ref[...]
        if act == "relu":
            y = jnp.maximum(y, 0.0)
        elif act == "gelu":
            y = _gelu(y)
        elif act == "tanh":
            y = jnp.tanh(y)
        elif act == "sigmoid":
            y = jax.nn.sigmoid(y)
        o_ref[...] = y.astype(o_ref.dtype)


def fused_matmul(x, w, scale=None, shift=None, act="none"):
    """act(  (x @ w) * scale + shift  ),  x:(M,K) w:(K,N) -> (M,N) f32.

    MXU inputs are cast to bf16; accumulation is f32 in VMEM scratch.
    M/K/N are zero-padded to tile multiples (K,N to multiples of 128).
    """
    m, k = x.shape
    k2, n = w.shape
    assert k == k2
    if scale is None:
        scale = jnp.ones((n,), jnp.float32)
    if shift is None:
        shift = jnp.zeros((n,), jnp.float32)

    # tile selection (lane-dense N, 128-aligned K, VMEM-friendly sizes)
    kp = _round_up(k, 128)
    tk = next(c for c in (512, 384, 256, 128) if kp % c == 0)
    npad = _round_up(n, 128)
    tn = 256 if npad % 256 == 0 else 128
    mp8 = _round_up(m, 8)
    tm = 256 if mp8 >= 256 else mp8
    mp = _round_up(m, tm)

    xb = jnp.pad(x.astype(jnp.bfloat16), ((0, mp - m), (0, kp - k)))
    wb = jnp.pad(w.astype(jnp.bfloat16), ((0, kp - k), (0, npad - n)))
    sc = jnp.pad(scale.astype(jnp.float32).reshape(1, n), ((0, 0), (0, npad - n)))
    sh = jnp.pad(shift.astype(jnp.float32).reshape(1, n), ((0, 0), (0, npad - n)))

    grid = (mp // tm, npad // tn, kp // tk)
    flops = 2 * mp * kp * npad
    transcend = mp * npad if act in ("gelu", "tanh", "sigmoid") else 0
    bytes_accessed = xb.size * 2 + wb.size * 2 + mp * npad * 4 + 2 * npad * 4

    out = pl.pallas_call(
        functools.partial(_matmul_scale_shift_act_kernel, act=act),
        out_shape=jax.ShapeDtypeStruct((mp, npad), jnp.float32),
        grid=grid,
        in_specs=[
            pl.BlockSpec((tm, tk), lambda i, j, kk: (i, kk)),
            pl.BlockSpec((tk, tn), lambda i, j, kk: (kk, j)),
            pl.BlockSpec((1, tn), lambda i, j, kk: (0, j)),
            pl.BlockSpec((1, tn), lambda i, j, kk: (0, j)),
        ],
        out_specs=pl.BlockSpec((tm, tn), lambda i, j, kk: (i, j)),
        scratch_shapes=[pltpu.VMEM((tm, tn), jnp.float32)],
        compiler_params=pltpu.CompilerParams(
            dimension_semantics=("parallel", "parallel", "arbitrary")),
        cost_estimate=pl.CostEstimate(flops=flops, transcendentals=transcend,
                                      bytes_accessed=bytes_accessed),
    )(xb, wb, sc, sh)
    return out[:m, :n]


# ----------------------------------------------------------------------------
# Kernel 2: depthwise 3x3 conv (padding=1) + folded BN + ReLU, NHWC
# ----------------------------------------------------------------------------
def _dw_conv_kernel(x_ref, w_ref, scale_ref, shift_ref, o_ref):
    hp, wp, cb = x_ref.shape[1], x_ref.shape[2], x_ref.shape[3]
    oh, ow = hp - 2, wp - 2
    x = x_ref[0]                                   # (Hp, Wp, Cb)
    acc = jnp.zeros((oh, ow, cb), jnp.float32)
    for di in range(3):
        for dj in range(3):
            acc = acc + x[di:di + oh, dj:dj + ow, :] * w_ref[di, dj]
    y = acc * scale_ref[0] + shift_ref[0]
    o_ref[0] = jnp.maximum(y, 0.0).astype(o_ref.dtype)


def depthwise_conv_bn_relu(x, w33, scale, shift, stride):
    """x:(N,H,W,C) NHWC, w33:(3,3,C), padding=1. Returns (N,OH,OW,C) f32.

    The kernel computes the stride-1 'same' output with channels on the lane
    axis; stride-2 layers are subsampled in the wrapper.
    # TODO(synk): use in-kernel strided windows for stride-2 depthwise layers
    # to avoid computing the intermediate stride-1 map (negligible here).
    """
    n, h, wd, c = x.shape
    cb = c if c <= 512 else 512
    assert c % cb == 0
    xp = jnp.pad(x, ((0, 0), (1, 1), (1, 1), (0, 0)))
    grid = (n, c // cb)
    flops = 2 * 9 * n * h * wd * c
    bytes_accessed = (xp.size + n * h * wd * c + w33.size + 2 * c) * 4

    out = pl.pallas_call(
        _dw_conv_kernel,
        out_shape=jax.ShapeDtypeStruct((n, h, wd, c), jnp.float32),
        grid=grid,
        in_specs=[
            pl.BlockSpec((1, h + 2, wd + 2, cb), lambda b, cc: (b, 0, 0, cc)),
            pl.BlockSpec((3, 3, cb), lambda b, cc: (0, 0, cc)),
            pl.BlockSpec((1, cb), lambda b, cc: (0, cc)),
            pl.BlockSpec((1, cb), lambda b, cc: (0, cc)),
        ],
        out_specs=pl.BlockSpec((1, h, wd, cb), lambda b, cc: (b, 0, 0, cc)),
        compiler_params=pltpu.CompilerParams(
            dimension_semantics=("parallel", "parallel")),
        cost_estimate=pl.CostEstimate(flops=flops, transcendentals=0,
                                      bytes_accessed=bytes_accessed),
    )(xp, w33, scale.reshape(1, c), shift.reshape(1, c))
    if stride > 1:
        out = out[:, ::stride, ::stride, :]
    return out


# ----------------------------------------------------------------------------
# conv / block wrappers (NHWC, all glue lives inside one jit)
# ----------------------------------------------------------------------------
def _im2col_nhwc(x, kh, kw, stride, pad):
    n, h, wd, c = x.shape
    xp = jnp.pad(x, ((0, 0), (pad, pad), (pad, pad), (0, 0)))
    oh = (h + 2 * pad - kh) // stride + 1
    ow = (wd + 2 * pad - kw) // stride + 1
    cols = []
    for di in range(kh):
        for dj in range(kw):
            cols.append(jax.lax.slice(
                xp, (0, di, dj, 0),
                (n, di + stride * (oh - 1) + 1, dj + stride * (ow - 1) + 1, c),
                (1, stride, stride, 1)))
    p = jnp.stack(cols, axis=3)                    # (N, OH, OW, KH*KW, C)
    return p.reshape(n * oh * ow, kh * kw * c), (n, oh, ow)


def conv3x3_bn_act(x, w_oihw, bias, bn_p, stride, act):
    """Dense 3x3 conv (padding=1) + optional BN + activation, NHWC."""
    oc, ic, kh, kw = w_oihw.shape
    patches, (n, oh, ow) = _im2col_nhwc(x, kh, kw, stride, 1)
    w2d = jnp.transpose(w_oihw, (2, 3, 1, 0)).reshape(kh * kw * ic, oc)
    if bn_p is not None:
        scale, shift = _fold_bn(bn_p, bias)
    else:
        scale, shift = None, bias
    y = fused_matmul(patches, w2d, scale, shift, act=act)
    return y.reshape(n, oh, ow, oc)


def dsc_forward(p, x, stride):
    """DepthSeperabelConv2d: depthwise 3x3+BN+ReLU then pointwise 1x1+BN+ReLU."""
    scale, shift = _fold_bn(p["dw_bn"])
    x = depthwise_conv_bn_relu(x, p["dw_w"], scale, shift, stride)
    n, h, wd, c = x.shape
    scale2, shift2 = _fold_bn(p["pw_bn"], p["pw_b"])
    y = fused_matmul(x.reshape(n * h * wd, c), p["pw_w"], scale2, shift2, act="relu")
    return y.reshape(n, h, wd, -1)


def multi_attn_fusion(p, x, y):
    """MultiAttnFusion (eval): cross-attention between image tokens and text."""
    b, h, wd, c = x.shape
    L = y.shape[1]
    q = x.reshape(b, h * wd, c)                            # (B, HW, C)
    key = _layer_norm(y, p["ln_g"], p["ln_b"])
    y2d = y.reshape(b * L, c)
    tg = fused_matmul(y2d, p["tanh_w"], None, p["tanh_b"], act="tanh")
    sg = fused_matmul(y2d, p["sig_w"], None, p["sig_b"], act="sigmoid")
    concated = (tg * sg).reshape(b, L, c)
    attn = jnp.einsum("bqc,bkc->bqk", q, key) * (c ** -0.5)
    attn = jax.nn.softmax(attn, axis=-1)                   # attn_drop = identity (eval)
    end = jnp.einsum("bqk,bkc->bqc", attn, concated).reshape(b, h, wd, c)
    end = conv3x3_bn_act(end, p["conv_end_w"], p["conv_end_b"], None,
                         stride=1, act="none")             # Dropout2d = identity (eval)
    return end + x


# ----------------------------------------------------------------------------
# MobileNet (width_multiplier = 1)
# ----------------------------------------------------------------------------
_DSC_CFG = {
    "conv1": [(64, 128, 2), (128, 128, 1)],
    "conv2": [(128, 256, 2), (256, 256, 1)],
    "conv3": [(256, 512, 2)] + [(512, 512, 1)] * 5,
    "conv4": [(512, 1024, 2), (1024, 1024, 1)],
}


def init_mobilenet_params(key, word_size=305, emb_dim=300, ans_size=223, hidden=64):
    kit = iter(jax.random.split(key, 192))

    def nrm(shape, s=1.0):
        return jax.random.normal(next(kit), shape, jnp.float32) * s

    def bn(c):
        return {"gamma": 1.0 + 0.1 * nrm((c,)),
                "beta": 0.1 * nrm((c,)),
                "mean": 0.1 * nrm((c,)),
                "var": jax.random.uniform(next(kit), (c,), jnp.float32, 0.5, 1.5)}

    def dsc(cin, cout):
        return {"dw_w": nrm((3, 3, cin), 1.0 / 3.0),
                "dw_bn": bn(cin),
                "pw_w": nrm((cin, cout), cin ** -0.5),
                "pw_b": 0.1 * nrm((cout,)),
                "pw_bn": bn(cout)}

    params = {
        "stem": {"conv1_w": nrm((64, 3, 3, 3), 27 ** -0.5),
                 "conv2_w": nrm((64, 64, 3, 3), 576 ** -0.5),
                 "bn": bn(64)},
        # TODO(synk): GloVe table is loaded from a .npy file in the original
        # QusEmbeddingMap; a random table is used here (no file I/O allowed).
        "qus_emb": {"table": nrm((word_size, emb_dim), 0.5),
                    "lin_w": nrm((emb_dim, hidden), emb_dim ** -0.5),
                    "lin_b": 0.1 * nrm((hidden,))},
        "attn": {"ln_g": 1.0 + 0.1 * nrm((hidden,)),
                 "ln_b": 0.1 * nrm((hidden,)),
                 "tanh_w": nrm((hidden, hidden), hidden ** -0.5),
                 "tanh_b": 0.1 * nrm((hidden,)),
                 "sig_w": nrm((hidden, hidden), hidden ** -0.5),
                 "sig_b": 0.1 * nrm((hidden,)),
                 "conv_end_w": nrm((hidden, hidden, 3, 3), (9 * hidden) ** -0.5),
                 "conv_end_b": 0.1 * nrm((hidden,))},
        "qus_linear": {"w": nrm((hidden, 1024), hidden ** -0.5),
                       "b": 0.1 * nrm((1024,)),
                       "ln_g": 1.0 + 0.1 * nrm((1024,)),
                       "ln_b": 0.1 * nrm((1024,))},
        "fc": {"w": nrm((1024, ans_size), 1024 ** -0.5),
               "b": 0.1 * nrm((ans_size,))},
    }
    for name, cfg in _DSC_CFG.items():
        params[name] = [dsc(cin, cout) for (cin, cout, _s) in cfg]
    return params


def mobilenet_forward(params, x_nchw, qus):
    """Eval-mode MobileNet forward: returns (B, ans_size) logits."""
    x = jnp.transpose(x_nchw, (0, 2, 3, 1))                # single NCHW->NHWC transpose
    # stem: Conv(3->64,s2,p1) -> Conv(64->64,s2,p1) -> BN -> GELU
    ps = params["stem"]
    x = conv3x3_bn_act(x, ps["conv1_w"], None, None, stride=2, act="none")
    x = conv3x3_bn_act(x, ps["conv2_w"], None, ps["bn"], stride=2, act="gelu")
    # question embedding: lookup -> Linear(300 -> 64)
    pq = params["qus_emb"]
    emb = jnp.take(pq["table"], qus, axis=0)               # (B, L, 300)
    b, L, d = emb.shape
    y = fused_matmul(emb.reshape(b * L, d), pq["lin_w"], None,
                     pq["lin_b"]).reshape(b, L, -1)
    # hidden_mix (Soft/Hard/BalancedTransMix) is training-only -> skipped.
    x = multi_attn_fusion(params["attn"], x, y)
    # depthwise-separable stages
    for name in ("conv1", "conv2", "conv3", "conv4"):
        for blk, (_cin, _cout, stride) in zip(params[name], _DSC_CFG[name]):
            x = dsc_forward(blk, x, stride)
    # heads
    x_avg = jnp.mean(x, axis=(1, 2))                       # AdaptiveAvgPool2d(1) + view
    pql = params["qus_linear"]
    yl = fused_matmul(y.reshape(b * L, -1), pql["w"], None,
                      pql["b"]).reshape(b, L, -1)
    yl = _gelu(_layer_norm(yl, pql["ln_g"], pql["ln_b"]))
    y_out = jnp.mean(yl, axis=1)                           # (B, 1024)
    logits = fused_matmul(x_avg * y_out, params["fc"]["w"], None, params["fc"]["b"])
    return logits


# ----------------------------------------------------------------------------
# self-tests for the two Pallas kernels (run once, small shapes)
# ----------------------------------------------------------------------------
def _self_test():
    k1, k2, k3, k4 = jax.random.split(jax.random.PRNGKey(42), 4)

    # fused matmul + scale/shift + relu  (tests M/K/N padding + K accumulation)
    x = jax.random.normal(k1, (37, 300), jnp.float32)
    w = jax.random.normal(k2, (300, 70), jnp.float32) * 0.05
    scale = 1.0 + 0.1 * jax.random.normal(k3, (70,), jnp.float32)
    shift = 0.1 * jax.random.normal(k4, (70,), jnp.float32)
    got = fused_matmul(x, w, scale, shift, act="relu")
    ref = jnp.maximum(
        jnp.dot(x.astype(jnp.bfloat16), w.astype(jnp.bfloat16),
                preferred_element_type=jnp.float32) * scale + shift, 0.0)
    assert jnp.allclose(got, ref, atol=2e-2, rtol=2e-2), \
        float(jnp.max(jnp.abs(got - ref)))

    # depthwise 3x3 + BN + relu, strides 1 and 2
    xd = jax.random.normal(k1, (2, 9, 10, 256), jnp.float32)
    wd = jax.random.normal(k2, (3, 3, 256), jnp.float32) * 0.2
    sc = 1.0 + 0.1 * jax.random.normal(k3, (256,), jnp.float32)
    sh = 0.1 * jax.random.normal(k4, (256,), jnp.float32)
    for stride in (1, 2):
        got = depthwise_conv_bn_relu(xd, wd, sc, sh, stride)
        ref = jax.lax.conv_general_dilated(
            xd, wd.reshape(3, 3, 1, 256), (stride, stride), [(1, 1), (1, 1)],
            dimension_numbers=("NHWC", "HWIO", "NHWC"), feature_group_count=256)
        ref = jnp.maximum(ref * sc + sh, 0.0)
        assert got.shape == ref.shape, (got.shape, ref.shape)
        assert jnp.allclose(got, ref, atol=1e-4, rtol=1e-4), \
            float(jnp.max(jnp.abs(got - ref)))


# ----------------------------------------------------------------------------
if __name__ == "__main__":
    key = jax.random.PRNGKey(0)
    kp, kx, kq = jax.random.split(key, 3)

    params = init_mobilenet_params(kp)

    B, H, W, L = 2, 64, 64, 8
    x = jax.random.normal(kx, (B, 3, H, W), jnp.float32)
    qus = jax.random.randint(kq, (B, L), 0, 305)

    _self_test()

    forward = jax.jit(mobilenet_forward)
    out = jax.block_until_ready(forward(params, x, qus))

    assert out.shape == (B, 223), out.shape
    assert bool(jnp.all(jnp.isfinite(out)))
    print("KERNEL_OK")
</pallas_src>

<mosaic_0001>
module attributes {stable_mosaic.version = 11 : i64} {
  func.func @_matmul_scale_shift_act_kernel(%arg0: i32, %arg1: i32, %arg2: i32, %arg3: memref<40x384xbf16, #tpu.memory_space<vmem>>, %arg4: memref<384x128xbf16, #tpu.memory_space<vmem>>, %arg5: memref<1x128xf32, #tpu.memory_space<vmem>>, %arg6: memref<1x128xf32, #tpu.memory_space<vmem>>, %arg7: memref<40x128xf32, #tpu.memory_space<vmem>>, %arg8: memref<40x128xf32, #tpu.memory_space<vmem>>) attributes {dimension_semantics = [#tpu.dimension_semantics<parallel>, #tpu.dimension_semantics<parallel>, #tpu.dimension_semantics<arbitrary>], iteration_bounds = array<i64: 1, 1, 1>, scalar_prefetch = 0 : i64, scratch_operands = 1 : i64, tpu.core_type = #tpu.core_type<tc>, window_params = [{transform_indices = @transform_0, window_bounds = array<i64: 40, 384>}, {transform_indices = @transform_1, window_bounds = array<i64: 384, 128>}, {transform_indices = @transform_2, window_bounds = array<i64: 1, 128>}, {transform_indices = @transform_3, window_bounds = array<i64: 1, 128>}, {transform_indices = @transform_4, window_bounds = array<i64: 40, 128>}]} {
    %c0_i32 = arith.constant 0 : i32
    %0 = arith.cmpi eq, %arg2, %c0_i32 : i32
    %1 = arith.extui %0 : i1 to i32
    %c0_i32_0 = arith.constant 0 : i32
    %2 = arith.cmpi ne, %1, %c0_i32_0 : i32
    scf.if %2 {
      %cst_10 = arith.constant 0.000000e+00 : f32
      %12 = vector.broadcast %cst_10 : f32 to vector<40x128xf32>
      %c0_11 = arith.constant 0 : index
      %c0_12 = arith.constant 0 : index
      %13 = vector.load %arg8[%c0_11, %c0_12] : memref<40x128xf32, #tpu.memory_space<vmem>>, vector<40x128xf32>
      tpu.vector_store %arg8[%c0_11, %c0_12], %12 {strides = array<i32>} : memref<40x128xf32, #tpu.memory_space<vmem>>, vector<40x128xf32>,
    } else {
    }
    %c0 = arith.constant 0 : index
    %c0_1 = arith.constant 0 : index
    %3 = vector.load %arg8[%c0, %c0_1] : memref<40x128xf32, #tpu.memory_space<vmem>>, vector<40x128xf32>
    %c0_2 = arith.constant 0 : index
    %c0_3 = arith.constant 0 : index
    %4 = vector.load %arg3[%c0_2, %c0_3] : memref<40x384xbf16, #tpu.memory_space<vmem>>, vector<40x384xbf16>
    %c0_4 = arith.constant 0 : index
    %c0_5 = arith.constant 0 : index
    %5 = vector.load %arg4[%c0_4, %c0_5] : memref<384x128xbf16, #tpu.memory_space<vmem>>, vector<384x128xbf16>
    %cst = arith.constant dense<0.000000e+00> : vector<40x128xf32>
    %6 = tpu.matmul %4, %5, %cst {dimension_numbers = #tpu.dot_dimension_numbers<[1], [0], [0], [1], [0, 0, 1, 1], [], []>} : vector<40x384xbf16>, vector<384x128xbf16>, vector<40x128xf32> -> vector<40x128xf32>
    %7 = arith.addf %3, %6 : vector<40x128xf32>
    %c0_6 = arith.constant 0 : index
    %c0_7 = arith.constant 0 : index
    %8 = vector.load %arg8[%c0_6, %c0_7] : memref<40x128xf32, #tpu.memory_space<vmem>>, vector<40x128xf32>
    tpu.vector_store %arg8[%c0_6, %c0_7], %7 {strides = array<i32>} : memref<40x128xf32, #tpu.memory_space<vmem>>, vector<40x128xf32>,
    %c0_i32_8 = arith.constant 0 : i32
    %9 = arith.cmpi eq, %arg2, %c0_i32_8 : i32
    %10 = arith.extui %9 : i1 to i32
    %c0_i32_9 = arith.constant 0 : i32
    %11 = arith.cmpi ne, %10, %c0_i32_9 : i32
    scf.if %11 {
      %c0_10 = arith.constant 0 : index
      %c0_11 = arith.constant 0 : index
      %12 = vector.load %arg8[%c0_10, %c0_11] : memref<40x128xf32, #tpu.memory_space<vmem>>, vector<40x128xf32>
      %c0_12 = arith.constant 0 : index
      %c0_13 = arith.constant 0 : index
      %13 = vector.load %arg5[%c0_12, %c0_13] : memref<1x128xf32, #tpu.memory_space<vmem>>, vector<1x128xf32>
      %14 = vector.broadcast %13 : vector<1x128xf32> to vector<40x128xf32>
      %15 = arith.mulf %12, %14 : vector<40x128xf32>
      %c0_14 = arith.constant 0 : index
      %c0_15 = arith.constant 0 : index
      %16 = vector.load %arg6[%c0_14, %c0_15] : memref<1x128xf32, #tpu.memory_space<vmem>>, vector<1x128xf32>
      %17 = vector.broadcast %16 : vector<1x128xf32> to vector<40x128xf32>
      %18 = arith.addf %15, %17 : vector<40x128xf32>
      %cst_16 = arith.constant 0.000000e+00 : f32
      %19 = vector.broadcast %cst_16 : f32 to vector<40x128xf32>
      %20 = arith.maximumf %18, %19 : vector<40x128xf32>
      %c0_17 = arith.constant 0 : index
      %c0_18 = arith.constant 0 : index
      %21 = vector.load %arg7[%c0_17, %c0_18] : memref<40x128xf32, #tpu.memory_space<vmem>>, vector<40x128xf32>
      tpu.vector_store %arg7[%c0_17, %c0_18], %20 {strides = array<i32>} : memref<40x128xf32, #tpu.memory_space<vmem>>, vector<40x128xf32>,
    } else {
    }
    return
  }
  func.func @transform_0(%arg0: i32, %arg1: i32, %arg2: i32) -> (i32, i32) {
    %c0_i32 = arith.constant 0 : i32
    return %arg0, %arg2 : i32, i32
  }
  func.func @transform_1(%arg0: i32, %arg1: i32, %arg2: i32) -> (i32, i32) {
    %c0_i32 = arith.constant 0 : i32
    return %arg2, %arg1 : i32, i32
  }
  func.func @transform_2(%arg0: i32, %arg1: i32, %arg2: i32) -> (i32, i32) {
    %c0_i32 = arith.constant 0 : i32
    %c0_i32_0 = arith.constant 0 : i32
    return %c0_i32, %arg1 : i32, i32
  }
  func.func @transform_3(%arg0: i32, %arg1: i32, %arg2: i32) -> (i32, i32) {
    %c0_i32 = arith.constant 0 : i32
    %c0_i32_0 = arith.constant 0 : i32
    return %c0_i32, %arg1 : i32, i32
  }
  func.func @transform_4(%arg0: i32, %arg1: i32, %arg2: i32) -> (i32, i32) {
    %c0_i32 = arith.constant 0 : i32
    return %arg0, %arg1 : i32, i32
  }
}

</mosaic_0001>

<llo_original>
// kernel: tpu_custom_call.1
$region0: #{tpu_custom_call.1}
  #allocation0 [shape = 'u32[]', space=smem, size = 0x4, offset = 0x4, fixed_abs, tag = 'smem constant byte address 0x4 - core index']
  #allocation1 [shape = 'u32[144,128]{1,0:T(1,128)}', space=vmem, size = 0x12000, scoped, tag = 'internal scratch']
  #allocation2 [shape = 'f32[40,128]{1,0:T(8,128)}', space=vmem, size = 0x5000, scoped, tag = 'scratch operand']
  %s0 = inlined_call_operand.hbm [shape: bf16[40,384], index: 0, kind: input, shape index: {}]
  %s1 = inlined_call_operand.hbm [shape: bf16[384,128], index: 1, kind: input, shape index: {}]
  %s2 = inlined_call_operand.vmem [shape: f32[1,128], index: 2, kind: input, shape index: {}]
  %s3 = inlined_call_operand.vmem [shape: f32[1,128], index: 3, kind: input, shape index: {}]
  %s4 = inlined_call_operand.hbm [shape: f32[40,128], index: 4, kind: output, shape index: {}]
  %s5 = sld [smem:[#allocation0]]
  $region42: #{tpu_custom_call.1} parent=0
    _
  %s7 = ssub.s32 1, %s5
  %s8 = scalar_select 0, %s7, %s5
  $region1: #{tpu_custom_call.1} parent=0
    #allocation3 [shape = 'u8[30720]{0}', space=vmem, size = 0x7800, scoped, tag = 'input window, operand 0, single buffered']
    #allocation4 [shape = 's32[1]{0}', space=sflag, size = 0x4, scoped, tag = 'scoped memory for tpu_custom_call.1']
    #allocation5 [shape = 's32[1]{0}', space=sflag, size = 0x4, scoped, tag = 'scoped memory for tpu_custom_call.1']
    #allocation6 [shape = 'u8[98304]{0}', space=vmem, size = 0x18000, scoped, tag = 'input window, operand 1, single buffered']
    #allocation7 [shape = 's32[1]{0}', space=sflag, size = 0x4, scoped, tag = 'scoped memory for tpu_custom_call.1']
    #allocation8 [shape = 'u8[20480]{0}', space=vmem, size = 0x5000, scoped, tag = 'output window, operand 0, single buffered']
    %9 = vsyncpa [#allocation4], 0
    %10 = vsyncpa [#allocation7], 0
    %11 = vsyncpa [#allocation5], 0
    // Predicated region
    $region2: #{tpu_custom_call.1} parent=1 // pred_check
      _
    $region3: #{tpu_custom_call.1} parent=1 // pred_check_branch
      %13 = sbr.rel (0) target = $region5
    $region4: #{tpu_custom_call.1} parent=1 // pred_region
      %s15 = ssub.s32 960, 960
      %16 = vsyncadd [#allocation4], %s15
      %s17 = sshll.u32 [#allocation3], 4
      %s18 = int_to_ptr.vmem [resolvable:$true] %s17
      %23 = dma.hbm_to_vmem [thread:$0]  %s0, 960, %s18, [#allocation4], 192, 192, 12
    $region5: #{tpu_custom_call.1} parent=1 // pred_fallthru
      _
    // Predicated region
    $region6: #{tpu_custom_call.1} parent=1 // pred_check
      _
    $region7: #{tpu_custom_call.1} parent=1 // pred_check_branch
      %25 = sbr.rel (0) target = $region9
    $region8: #{tpu_custom_call.1} parent=1 // pred_region
      %s27 = ssub.s32 3072, 3072
      %28 = vsyncadd [#allocation7], %s27
      %s29 = sshll.u32 [#allocation6], 4
      %s30 = int_to_ptr.vmem [resolvable:$true] %s29
      %35 = dma.hbm_to_vmem [thread:$0]  %s1, 3072, %s30, [#allocation7], 64, 64, 4
    $region9: #{tpu_custom_call.1} parent=1 // pred_fallthru
      _
    // Predicated region
    $region10: #{tpu_custom_call.1} parent=1 // pred_check
      _
    $region11: #{tpu_custom_call.1} parent=1 // pred_check_branch
      %37 = sbr.rel (0) target = $region13
    $region12: #{tpu_custom_call.1} parent=1 // pred_region
      _
    $region13: #{tpu_custom_call.1} parent=1 // pred_fallthru
      _
    // Predicated region
    $region14: #{tpu_custom_call.1} parent=1 // pred_check
      _
    $region15: #{tpu_custom_call.1} parent=1 // pred_check_branch
      %39 = sbr.rel (0) target = $region17
    $region16: #{tpu_custom_call.1} parent=1 // pred_region
      _
    $region17: #{tpu_custom_call.1} parent=1 // pred_fallthru
      _
    // Predicated region
    $region18: #{tpu_custom_call.1} parent=1 // pred_check
      _
    $region19: #{tpu_custom_call.1} parent=1 // pred_check_branch
      %41 = sbr.rel (0) target = $region21
    $region20: #{tpu_custom_call.1} parent=1 // pred_region
      %42 = dma.done [#allocation4], 960
    $region21: #{tpu_custom_call.1} parent=1 // pred_fallthru
      _
    // Predicated region
    $region22: #{tpu_custom_call.1} parent=1 // pred_check
      _
    $region23: #{tpu_custom_call.1} parent=1 // pred_check_branch
      %44 = sbr.rel (0) target = $region25
    $region24: #{tpu_custom_call.1} parent=1 // pred_region
      %45 = dma.done [#allocation7], 3072
    $region25: #{tpu_custom_call.1} parent=1 // pred_fallthru
      _
    %p47 = scmp.eq.s32.totalorder 0, 0
    // Predicated region
    $region26: #{tpu_custom_call.1} parent=1 // pred_check
      %p48 = pneg %p47
    $region27: #{tpu_custom_call.1} parent=1 // pred_check_branch
      %50 = sbr.rel (%p48) target = $region29
    $region28: #{tpu_custom_call.1} parent=1 // pred_region
      %51 = vst [vmem:[#allocation2] sm:$0xff] 0.0
      %52 = vst [vmem:[#allocation2 + $0x8] sm:$0xff] 0.0
      %53 = vst [vmem:[#allocation2 + $0x10] sm:$0xff] 0.0
      %54 = vst [vmem:[#allocation2 + $0x18] sm:$0xff] 0.0
      %55 = vst [vmem:[#allocation2 + $0x20] sm:$0xff] 0.0
    $region29: #{tpu_custom_call.1} parent=1 // pred_fallthru
      _
    %v56 = vld [vmem:[#allocation2] sm:$0xff]
    %v57 = vld [vmem:[#allocation2 + $0x8] sm:$0xff]
    %v58 = vld [vmem:[#allocation2 + $0x10] sm:$0xff]
    %v59 = vld [vmem:[#allocation2 + $0x18] sm:$0xff]
    %v60 = vld [vmem:[#allocation2 + $0x20] sm:$0xff]
    %v61 = vld [vmem:[#allocation3] sm:$0xff]
    %v62 = vld [vmem:[#allocation3 + $0x8] sm:$0xf]
    %v63 = vld [vmem:[#allocation3 + $0xc] sm:$0xff]
    %v64 = vld [vmem:[#allocation3 + $0x14] sm:$0xf]
    %v65 = vld [vmem:[#allocation3 + $0x18] sm:$0xff]
    %v66 = vld [vmem:[#allocation3 + $0x20] sm:$0xf]
    %v67 = vld [vmem:[#allocation3 + $0x24] sm:$0xff]
    %v68 = vld [vmem:[#allocation3 + $0x2c] sm:$0xf]
    %v69 = vld [vmem:[#allocation3 + $0x30] sm:$0xff]
    %v70 = vld [vmem:[#allocation3 + $0x38] sm:$0xf]
    %v71 = vld [vmem:[#allocation6] sm:$0xf]
    %v72 = vld [vmem:[#allocation6 + $0x4] sm:$0xf]
    %v73 = vld [vmem:[#allocation6 + $0x8] sm:$0xf]
    %v74 = vld [vmem:[#allocation6 + $0xc] sm:$0xf]
    %v75 = vld [vmem:[#allocation6 + $0x10] sm:$0xf]
    %v76 = vld [vmem:[#allocation6 + $0x14] sm:$0xf]
    %v77 = vld [vmem:[#allocation6 + $0x18] sm:$0xf]
    %v78 = vld [vmem:[#allocation6 + $0x1c] sm:$0xf]
    %v79 = vld [vmem:[#allocation6 + $0x20] sm:$0xf]
    %v80 = vld [vmem:[#allocation6 + $0x24] sm:$0xf]
    %v81 = vld [vmem:[#allocation6 + $0x28] sm:$0xf]
    %v82 = vld [vmem:[#allocation6 + $0x2c] sm:$0xf]
    %v83 = vld [vmem:[#allocation6 + $0x30] sm:$0xf]
    %v84 = vld [vmem:[#allocation6 + $0x34] sm:$0xf]
    %v85 = vld [vmem:[#allocation6 + $0x38] sm:$0xf]
    %v86 = vld [vmem:[#allocation6 + $0x3c] sm:$0xf]
    %v87 = vld [vmem:[#allocation6 + $0x40] sm:$0xf]
    %v88 = vld [vmem:[#allocation6 + $0x44] sm:$0xf]
    %v89 = vld [vmem:[#allocation6 + $0x48] sm:$0xf]
    %v90 = vld [vmem:[#allocation6 + $0x4c] sm:$0xf]
    %v91 = vld [vmem:[#allocation6 + $0x50] sm:$0xf]
    %v92 = vld [vmem:[#allocation6 + $0x54] sm:$0xf]
    %v93 = vld [vmem:[#allocation6 + $0x58] sm:$0xf]
    %v94 = vld [vmem:[#allocation6 + $0x5c] sm:$0xf]
    %v95 = vld [vmem:[#allocation6 + $0x60] sm:$0xf]
    %v96 = vld [vmem:[#allocation6 + $0x64] sm:$0xf]
    %v97 = vld [vmem:[#allocation6 + $0x68] sm:$0xf]
    %v98 = vld [vmem:[#allocation6 + $0x6c] sm:$0xf]
    %v99 = vld [vmem:[#allocation6 + $0x70] sm:$0xf]
    %v100 = vld [vmem:[#allocation6 + $0x74] sm:$0xf]
    %v101 = vld [vmem:[#allocation6 + $0x78] sm:$0xf]
    %v102 = vld [vmem:[#allocation6 + $0x7c] sm:$0xf]
    %v103 = vld [vmem:[#allocation6 + $0x80] sm:$0xf]
    %v104 = vld [vmem:[#allocation6 + $0x84] sm:$0xf]
    %v105 = vld [vmem:[#allocation6 + $0x88] sm:$0xf]
    %v106 = vld [vmem:[#allocation6 + $0x8c] sm:$0xf]
    %v107 = vld [vmem:[#allocation6 + $0x90] sm:$0xf]
    %v108 = vld [vmem:[#allocation6 + $0x94] sm:$0xf]
    %v109 = vld [vmem:[#allocation6 + $0x98] sm:$0xf]
    %v110 = vld [vmem:[#allocation6 + $0x9c] sm:$0xf]
    %v111 = vld [vmem:[#allocation6 + $0xa0] sm:$0xf]
    %v112 = vld [vmem:[#allocation6 + $0xa4] sm:$0xf]
    %v113 = vld [vmem:[#allocation6 + $0xa8] sm:$0xf]
    %v114 = vld [vmem:[#allocation6 + $0xac] sm:$0xf]
    %v115 = vld [vmem:[#allocation6 + $0xb0] sm:$0xf]
    %v116 = vld [vmem:[#allocation6 + $0xb4] sm:$0xf]
    %v117 = vld [vmem:[#allocation6 + $0xb8] sm:$0xf]
    %v118 = vld [vmem:[#allocation6 + $0xbc] sm:$0xf]
    %v129 = vunpack.c.l.b16 %v61
    %v130 = vunpack.c.h.b16 %v61
    %v131 = vunpack.c.l.b16 %v62
    %v132 = vunpack.c.l.b16 %v63
    %v133 = vunpack.c.h.b16 %v63
    %v134 = vunpack.c.l.b16 %v64
    %v135 = vunpack.c.l.b16 %v65
    %v136 = vunpack.c.h.b16 %v65
    %v137 = vunpack.c.l.b16 %v66
    %v138 = vunpack.c.l.b16 %v67
    %v139 = vunpack.c.h.b16 %v67
    %v140 = vunpack.c.l.b16 %v68
    %v141 = vunpack.c.l.b16 %v69
    %v142 = vunpack.c.h.b16 %v69
    %v143 = vunpack.c.l.b16 %v70
    %v144 = vpack.c.b16 %v132, %v129
    %v145 = vpack.c.b16 %v133, %v130
    %v146 = vpack.c.b16 %v134, %v131
    %v147 = vpack.c.b16 %v138, %v135
    %v148 = vpack.c.b16 %v139, %v136
    %v149 = vpack.c.b16 %v140, %v137
    %v150 = vpack.c.b16 %v141, %v141
    %v151 = vpack.c.b16 %v142, %v142
    %v152 = vpack.c.b16 %v143, %v143
    %v210 = vunpack.c.l.b16 %v71
    %v211 = vunpack.c.l.b16 %v72
    %v212 = vunpack.c.l.b16 %v73
    %v213 = vunpack.c.l.b16 %v74
    %v214 = vunpack.c.l.b16 %v75
    %v215 = vunpack.c.l.b16 %v76
    %v216 = vunpack.c.l.b16 %v77
    %v217 = vunpack.c.l.b16 %v78
    %v218 = vunpack.c.l.b16 %v79
    %v219 = vunpack.c.l.b16 %v80
    %v220 = vunpack.c.l.b16 %v81
    %v221 = vunpack.c.l.b16 %v82
    %v222 = vunpack.c.l.b16 %v83
    %v223 = vunpack.c.l.b16 %v84
    %v224 = vunpack.c.l.b16 %v85
    %v225 = vunpack.c.l.b16 %v86
    %v226 = vunpack.c.l.b16 %v87
    %v227 = vunpack.c.l.b16 %v88
    %v228 = vunpack.c.l.b16 %v89
    %v229 = vunpack.c.l.b16 %v90
    %v230 = vunpack.c.l.b16 %v91
    %v231 = vunpack.c.l.b16 %v92
    %v232 = vunpack.c.l.b16 %v93
    %v233 = vunpack.c.l.b16 %v94
    %v234 = vunpack.c.l.b16 %v95
    %v235 = vunpack.c.l.b16 %v96
    %v236 = vunpack.c.l.b16 %v97
    %v237 = vunpack.c.l.b16 %v98
    %v238 = vunpack.c.l.b16 %v99
    %v239 = vunpack.c.l.b16 %v100
    %v240 = vunpack.c.l.b16 %v101
    %v241 = vunpack.c.l.b16 %v102
    %v242 = vunpack.c.l.b16 %v103
    %v243 = vunpack.c.l.b16 %v104
    %v244 = vunpack.c.l.b16 %v105
    %v245 = vunpack.c.l.b16 %v106
    %v246 = vunpack.c.l.b16 %v107
    %v247 = vunpack.c.l.b16 %v108
    %v248 = vunpack.c.l.b16 %v109
    %v249 = vunpack.c.l.b16 %v110
    %v250 = vunpack.c.l.b16 %v111
    %v251 = vunpack.c.l.b16 %v112
    %v252 = vunpack.c.l.b16 %v113
    %v253 = vunpack.c.l.b16 %v114
    %v254 = vunpack.c.l.b16 %v115
    %v255 = vunpack.c.l.b16 %v116
    %v256 = vunpack.c.l.b16 %v117
    %v257 = vunpack.c.l.b16 %v118
    %v258 = vpack.c.b16 %v211, %v210
    %v259 = vpack.c.b16 %v213, %v212
    %v260 = vpack.c.b16 %v215, %v214
    %v261 = vpack.c.b16 %v217, %v216
    %v262 = vpack.c.b16 %v219, %v218
    %v263 = vpack.c.b16 %v221, %v220
    %v264 = vpack.c.b16 %v223, %v222
    %v265 = vpack.c.b16 %v225, %v224
    %v266 = vpack.c.b16 %v227, %v226
    %v267 = vpack.c.b16 %v229, %v228
    %v268 = vpack.c.b16 %v231, %v230
    %v269 = vpack.c.b16 %v233, %v232
    %v270 = vpack.c.b16 %v235, %v234
    %v271 = vpack.c.b16 %v237, %v236
    %v272 = vpack.c.b16 %v239, %v238
    %v273 = vpack.c.b16 %v241, %v240
    %v274 = vpack.c.b16 %v243, %v242
    %v275 = vpack.c.b16 %v245, %v244
    %v276 = vpack.c.b16 %v247, %v246
    %v277 = vpack.c.b16 %v249, %v248
    %v278 = vpack.c.b16 %v251, %v250
    %v279 = vpack.c.b16 %v253, %v252
    %v280 = vpack.c.b16 %v255, %v254
    %v281 = vpack.c.b16 %v257, %v256
    %306 = vmatprep.subr.bf16.mxu0 0
    %307 = vmatpush1.bf16.msra.mxu0 %v258
    %308 = vmatprep.subr.bf16.mxu0 0
    %309 = vmatpush1.bf16.msra.mxu0 %v259
    %310 = vmatprep.subr.bf16.mxu0 0
    %311 = vmatpush1.bf16.msra.mxu0 %v260
    %312 = vmatprep.subr.bf16.mxu0 0
    %313 = vmatpush1.bf16.msra.mxu0 %v261
    %314 = vmatprep.subr.bf16.mxu0 0
    %315 = vmatpush1.bf16.msra.mxu0 %v262
    %316 = vmatprep.subr.bf16.mxu0 0
    %317 = vmatpush1.bf16.msra.mxu0 %v263
    %318 = vmatprep.subr.bf16.mxu0 0
    %319 = vmatpush1.bf16.msra.mxu0 %v264
    %320 = vmatprep.subr.bf16.mxu0 0
    %321 = vmatpush1.bf16.msra.mxu0 %v265
    %322 = vmatprep.subr.bf16.mxu0 0
    %323 = vmatpush1.bf16.msra.mxu0 %v266
    %324 = vmatprep.subr.bf16.mxu0 0
    %325 = vmatpush1.bf16.msra.mxu0 %v267
    %326 = vmatprep.subr.bf16.mxu0 0
    %327 = vmatpush1.bf16.msra.mxu0 %v268
    %328 = vmatprep.subr.bf16.mxu0 0
    %329 = vmatpush1.bf16.msra.mxu0 %v269
    %330 = vmatprep.subr.bf16.mxu0 0
    %331 = vmatpush1.bf16.msra.mxu0 %v270
    %332 = vmatprep.subr.bf16.mxu0 0
    %333 = vmatpush1.bf16.msra.mxu0 %v271
    %334 = vmatprep.subr.bf16.mxu0 0
    %335 = vmatpush1.bf16.msra.mxu0 %v272
    %336 = vmatprep.subr.bf16.mxu0 0
    %337 = vmatpush1.bf16.msra.mxu0 %v273
    %338 = vmatprep.mubr.bf16.mxu0 %v145
    %339 = vmatmul.mubr.bf16.gmra.mrb[0].mxu0 %v144
    %v340 = vpop.f32.mrb[0].mxu0
    %v341 = vadd.f32 0.0, %v340
    %v342 = vpop.f32.mrb[0].mxu0
    %v343 = vpop.f32.mrb[0].mxu0
    %v344 = vadd.f32 0.0, %v343
    %v345 = vpop.f32.mrb[0].mxu0
    %346 = vmatprep.mubr.bf16.mxu0 %v148
    %347 = vmatmul.mubr.bf16.gmra.mrb[0].mxu0 %v147
    %v348 = vpop.f32.mrb[0].mxu0
    %v349 = vadd.f32 0.0, %v348
    %v350 = vpop.f32.mrb[0].mxu0
    %v351 = vpop.f32.mrb[0].mxu0
    %v352 = vadd.f32 0.0, %v351
    %v353 = vpop.f32.mrb[0].mxu0
    %354 = vmatprep.mubr.bf16.mxu0 %v151
    %355 = vmatmul.mubr.bf16.gmra.mrb[0].mxu0 %v150
    %v356 = vpop.f32.mrb[0].mxu0
    %v357 = vadd.f32 0.0, %v356
    %v358 = vpop.f32.mrb[0].mxu0
    %v359 = vpop.f32.mrb[0].mxu0
    %v360 = vpop.f32.mrb[0].mxu0
    %361 = vdwg.mxu0
    %362 = vmatprep.subr.bf16.mxu0 0
    %363 = vmatpush1.bf16.msra.mxu0 %v274
    %364 = vmatprep.subr.bf16.mxu0 0
    %365 = vmatpush1.bf16.msra.mxu0 %v275
    %366 = vmatprep.subr.bf16.mxu0 0
    %367 = vmatpush1.bf16.msra.mxu0 %v276
    %368 = vmatprep.subr.bf16.mxu0 0
    %369 = vmatpush1.bf16.msra.mxu0 %v277
    %370 = vmatprep.subr.bf16.mxu0 0
    %371 = vmatpush1.bf16.msra.mxu0 %v278
    %372 = vmatprep.subr.bf16.mxu0 0
    %373 = vmatpush1.bf16.msra.mxu0 %v279
    %374 = vmatprep.subr.bf16.mxu0 0
    %375 = vmatpush1.bf16.msra.mxu0 %v280
    %376 = vmatprep.subr.bf16.mxu0 0
    %377 = vmatpush1.bf16.msra.mxu0 %v281
    %378 = vmatprep.subr.bf16.mxu0 0
    %379 = vmatpush1.bf16.msra.mxu0 0
    %380 = vmatprep.subr.bf16.mxu0 0
    %381 = vmatpush1.bf16.msra.mxu0 0
    %382 = vmatprep.subr.bf16.mxu0 0
    %383 = vmatpush1.bf16.msra.mxu0 0
    %384 = vmatprep.subr.bf16.mxu0 0
    %385 = vmatpush1.bf16.msra.mxu0 0
    %386 = vmatprep.subr.bf16.mxu0 0
    %387 = vmatpush1.bf16.msra.mxu0 0
    %388 = vmatprep.subr.bf16.mxu0 0
    %389 = vmatpush1.bf16.msra.mxu0 0
    %390 = vmatprep.subr.bf16.mxu0 0
    %391 = vmatpush1.bf16.msra.mxu0 0
    %392 = vmatprep.subr.bf16.mxu0 0
    %393 = vmatpush1.bf16.msra.mxu0 0
    %394 = vmatprep.mubr.bf16.mxu0 0
    %395 = vmatmul.mubr.bf16.gmra.mrb[0].mxu0 %v146
    %v396 = vpop.f32.mrb[0].mxu0
    %v397 = vadd.f32 %v341, %v396
    %v398 = vpop.f32.mrb[0].mxu0
    %v399 = vpop.f32.mrb[0].mxu0
    %v400 = vadd.f32 %v344, %v399
    %v401 = vpop.f32.mrb[0].mxu0
    %402 = vmatprep.mubr.bf16.mxu0 0
    %403 = vmatmul.mubr.bf16.gmra.mrb[0].mxu0 %v149
    %v404 = vpop.f32.mrb[0].mxu0
    %v405 = vadd.f32 %v349, %v404
    %v406 = vpop.f32.mrb[0].mxu0
    %v407 = vpop.f32.mrb[0].mxu0
    %v408 = vadd.f32 %v352, %v407
    %v409 = vpop.f32.mrb[0].mxu0
    %410 = vmatprep.mubr.bf16.mxu0 0
    %411 = vmatmul.mubr.bf16.gmra.mrb[0].mxu0 %v152
    %v412 = vpop.f32.mrb[0].mxu0
    %v413 = vadd.f32 %v357, %v412
    %v414 = vpop.f32.mrb[0].mxu0
    %v415 = vpop.f32.mrb[0].mxu0
    %v416 = vpop.f32.mrb[0].mxu0
    %417 = vdwg.mxu0
    %v418 = vadd.f32 %v56, %v397
    %v419 = vadd.f32 %v57, %v400
    %v420 = vadd.f32 %v58, %v405
    %v421 = vadd.f32 %v59, %v408
    %v422 = vadd.f32 %v60, %v413
    %423 = vst [vmem:[#allocation2] sm:$0xff] %v418
    %424 = vst [vmem:[#allocation2 + $0x8] sm:$0xff] %v419
    %425 = vst [vmem:[#allocation2 + $0x10] sm:$0xff] %v420
    %426 = vst [vmem:[#allocation2 + $0x18] sm:$0xff] %v421
    %427 = vst [vmem:[#allocation2 + $0x20] sm:$0xff] %v422
    // Predicated region
    $region30: #{tpu_custom_call.1} parent=1 // pred_check
      %p428 = pneg %p47
    $region31: #{tpu_custom_call.1} parent=1 // pred_check_branch
      %430 = sbr.rel (%p428) target = $region33
    $region32: #{tpu_custom_call.1} parent=1 // pred_region
      %v431 = vld [vmem:[#allocation2] sm:$0xff]
      %v432 = vld [vmem:[#allocation2 + $0x8] sm:$0xff]
      %v433 = vld [vmem:[#allocation2 + $0x10] sm:$0xff]
      %v434 = vld [vmem:[#allocation2 + $0x18] sm:$0xff]
      %v435 = vld [vmem:[#allocation2 + $0x20] sm:$0xff]
      %v436 = vld [vmem:[%s2] sm:$0x1]
      %v438 = vlaneseq
      %v439 = vshrl.u32 %v438, 7
      %v440 = vsub.s32 0, %v439
      %v441 = vrot.slane %v436, %v440
      %v443 = vmul.f32 %v431, %v441
      %v444 = vmul.f32 %v432, %v441
      %v445 = vmul.f32 %v433, %v441
      %v446 = vmul.f32 %v434, %v441
      %v447 = vmul.f32 %v435, %v441
      %v448 = vld [vmem:[%s3] sm:$0x1]
      %v450 = vlaneseq
      %v451 = vshrl.u32 %v450, 7
      %v452 = vsub.s32 0, %v451
      %v453 = vrot.slane %v448, %v452
      %v455 = vadd.f32 %v443, %v453
      %v456 = vadd.f32 %v444, %v453
      %v457 = vadd.f32 %v445, %v453
      %v458 = vadd.f32 %v446, %v453
      %v459 = vadd.f32 %v447, %v453
      %v460 = vmax.f32 %v455, 0.0
      %v461 = vmax.f32 %v456, 0.0
      %v462 = vmax.f32 %v457, 0.0
      %v463 = vmax.f32 %v458, 0.0
      %v464 = vmax.f32 %v459, 0.0
      %465 = vst [vmem:[#allocation8] sm:$0xff] %v460
      %466 = vst [vmem:[#allocation8 + $0x8] sm:$0xff] %v461
      %467 = vst [vmem:[#allocation8 + $0x10] sm:$0xff] %v462
      %468 = vst [vmem:[#allocation8 + $0x18] sm:$0xff] %v463
      %469 = vst [vmem:[#allocation8 + $0x20] sm:$0xff] %v464
    $region33: #{tpu_custom_call.1} parent=1 // pred_fallthru
      _
    // Predicated region
    $region34: #{tpu_custom_call.1} parent=1 // pred_check
      _
    $region35: #{tpu_custom_call.1} parent=1 // pred_check_branch
      %471 = sbr.rel (0) target = $region37
    $region36: #{tpu_custom_call.1} parent=1 // pred_region
      %s473 = ssub.s32 640, 640
      %474 = vsyncadd [#allocation5], %s473
      %s475 = sshll.u32 [#allocation8], 4
      %s476 = int_to_ptr.vmem [resolvable:$true] %s475
      %481 = dma.vmem_to_hbm [thread:$0]  %s476, 640, %s4, [#allocation5], 128, 128, 8
    $region37: #{tpu_custom_call.1} parent=1 // pred_fallthru
      _
    // Predicated region
    $region38: #{tpu_custom_call.1} parent=1 // pred_check
      _
    $region39: #{tpu_custom_call.1} parent=1 // pred_check_branch
      %483 = sbr.rel (0) target = $region41
    $region40: #{tpu_custom_call.1} parent=1 // pred_region
      %484 = dma.done [#allocation5], 640
    $region41: #{tpu_custom_call.1} parent=1 // pred_fallthru
      _
    %485 = vsyncpa [#allocation4], 1
    %486 = vsyncpa [#allocation7], 1
    %487 = vsyncpa [#allocation5], 1

</llo_original>
